<compile_context>
chip_gen: v7x
topology: tpu7x:2x2x1
jax: 0.10.0
libtpu: 0.0.40
codegen_flags: <defaults>
</compile_context>

<pallas_src>
import math

import jax
import jax.numpy as jnp
import numpy as np
from jax.experimental import pallas as pl
from jax.experimental.pallas import tpu as pltpu

LANE = 128
SUBLANE = 8


def _round_up(x: int, m: int) -> int:
    return ((x + m - 1) // m) * m


def _cdiv(a: int, b: int) -> int:
    return (a + b - 1) // b


# ----------------------------------------------------------------------------
# Parameter initialization (deterministic, mirrors the PyTorch __init__):
#   - Xavier-uniform init of (K, D) cluster centers
#   - Gram-Schmidt style orthogonalization exactly as in the module
# ----------------------------------------------------------------------------
def init_cluster_centers(cluster_number: int, embedding_dimension: int,
                         seed: int = 0, orthogonal: bool = True) -> np.ndarray:
    key = jax.random.PRNGKey(seed)
    bound = math.sqrt(6.0 / (cluster_number + embedding_dimension))
    centers = np.asarray(
        jax.random.uniform(key, (cluster_number, embedding_dimension),
                           minval=-bound, maxval=bound, dtype=jnp.float32)
    )
    if orthogonal:
        init = centers.copy()
        ortho = np.zeros_like(init)
        ortho[0] = init[0]
        for i in range(1, cluster_number):
            project = np.zeros_like(init[i])
            for j in range(i):
                u, v = init[j], init[i]
                project += (np.dot(u, v) / np.dot(u, u)) * u
            init[i] = init[i] - project
            ortho[i] = init[i] / np.linalg.norm(init[i], ord=2)
        centers = ortho
    return centers.astype(np.float32)


# ----------------------------------------------------------------------------
# Kernel: MXU matmul against pre-scaled, pre-transposed centers; square;
# compile-time pad mask; numerically-stable softmax (exact normalization);
# store only the un-padded [tb, K] slab.
# ----------------------------------------------------------------------------
def _make_kernel(valid_k: int, padded_k: int):
    def kernel(x_ref, ct_ref, o_ref):
        x = x_ref[...]                                  # [tb, D]  compute dtype
        ct = ct_ref[...]                                # [D, Kp]  compute dtype

        # s = batch @ (centers * ||c||^-1/2).T   (MXU, f32 accumulation)
        s = jnp.dot(x, ct, preferred_element_type=jnp.float32)   # [tb, Kp] f32
        logits = s * s                                  # == (x.c)^2 / ||c||

        if padded_k != valid_k:
            # Mask padded cluster columns (compile-time constants -> no input).
            col = jax.lax.broadcasted_iota(jnp.int32, (1, padded_k), 1)
            logits = jnp.where(col < valid_k, logits, -1e30)

        # Numerically-stable softmax over clusters; exact divide so rows sum
        # to exactly 1 (the kernel is HBM-bound, the divide is hidden).
        m = jnp.max(logits, axis=-1, keepdims=True)
        e = jnp.exp(logits - m)
        denom = jnp.sum(e, axis=-1, keepdims=True)
        p = e / denom                                   # [tb, Kp] f32

        o_ref[...] = p[:, :valid_k].astype(o_ref.dtype)
    return kernel


def _choose_tile_b(B: int, D: int, itemsize: int) -> int:
    # Target ~2 MiB of batch rows per tile so the ~0.35 us per-grid-step
    # overhead and DMA setup are amortized; multiple of 256 (feeds v6e/v7x's
    # 256x256 MXU cleanly), capped at 4096 rows.
    target_bytes = 2 << 20
    tb = (target_bytes // max(D * itemsize, 1)) // 256 * 256
    tb = max(256, min(4096, tb))
    if B > 256:
        # v7x has 2 TensorCores splitting a "parallel" grid axis: ensure the
        # grid has at least 2 steps for moderate-to-large B.
        tb = min(tb, _round_up(_cdiv(B, 2), 256))
    # Never larger than one 128-aligned tile covering B (v5e: keep tb a
    # multiple of 128 even in the small-B fallback).
    tb = min(tb, _round_up(B, 128))
    return tb


def cluster_assignment(batch: jax.Array, centers: jax.Array, *,
                       tile_b: int | None = None,
                       compute_dtype=jnp.bfloat16,
                       out_dtype=jnp.float32) -> jax.Array:
    """batch: [B, D], centers: [K, D] -> [B, K] soft assignment (softmax rows)."""
    B, D = batch.shape
    K, D2 = centers.shape
    assert D == D2

    compute_bytes = jnp.dtype(compute_dtype).itemsize
    out_bytes = jnp.dtype(out_dtype).itemsize

    # Lane-dense padded cluster axis for the matmul / softmax intermediate.
    Kp = _round_up(max(K, LANE), LANE)

    # ---- hoisted, once-per-call prep (tiny: K x D) ----
    centers_f32 = centers.astype(jnp.float32)
    norm = jnp.sqrt(jnp.sum(centers_f32 * centers_f32, axis=-1, keepdims=True))  # [K,1]
    # Fold 1/||c|| into the centers: (x.c)^2/||c|| == (x.(c*||c||^-1/2))^2.
    # Zero-norm clusters map to logit 0 (reference would produce inf/NaN).
    scale = jnp.where(norm > 0.0, jax.lax.rsqrt(norm), 0.0)
    centers_scaled = centers_f32 * scale                                          # [K, D]
    centers_t = jnp.zeros((D, Kp), jnp.float32).at[:, :K].set(centers_scaled.T)
    centers_t = centers_t.astype(compute_dtype)

    batch_c = batch.astype(compute_dtype)

    # ---- tiling: ragged last tile, no wrapper-side padding ----
    tb = tile_b if tile_b is not None else _choose_tile_b(B, D, compute_bytes)
    tb = max(SUBLANE, tb)
    num_tiles = _cdiv(B, tb)

    # ---- VMEM footprint -> only override the scoped default when needed ----
    vmem_est = (2 * tb * D * compute_bytes      # batch tile (double-buffered)
                + 2 * D * Kp * compute_bytes    # centers^T (double-buffered alloc)
                + 2 * tb * K * out_bytes        # output tile (double-buffered)
                + 6 * tb * Kp * 4               # f32 temporaries (s, logits, e, ...)
                + (2 << 20))                    # fixed headroom
    cp_kwargs = dict(dimension_semantics=("parallel",))
    if vmem_est > (32 << 20):
        # Leave headroom below v7x's 64 MiB physical VMEM per TensorCore.
        cp_kwargs["vmem_limit_bytes"] = int(min(vmem_est, 56 << 20))

    cost = pl.CostEstimate(
        flops=2 * B * Kp * D,
        transcendentals=B * Kp,
        bytes_accessed=B * D * compute_bytes + D * Kp * compute_bytes
        + B * K * out_bytes,
    )

    out = pl.pallas_call(
        _make_kernel(K, Kp),
        out_shape=jax.ShapeDtypeStruct((B, K), out_dtype),
        grid_spec=pltpu.PrefetchScalarGridSpec(
            num_scalar_prefetch=0,
            grid=(num_tiles,),
            in_specs=[
                pl.BlockSpec((tb, D), lambda i: (i, 0)),    # batch tile (pipelined)
                pl.BlockSpec((D, Kp), lambda i: (0, 0)),    # scaled centers^T (resident)
            ],
            out_specs=pl.BlockSpec((tb, K), lambda i: (i, 0)),  # un-padded output
        ),
        compiler_params=pltpu.CompilerParams(**cp_kwargs),
        cost_estimate=cost,
    )(batch_c, centers_t)

    return out


# ----------------------------------------------------------------------------
# Reference (pure JAX) for verification
# ----------------------------------------------------------------------------
def cluster_assignment_ref(batch, centers):
    s = batch @ centers.T
    a = s ** 2
    norm = jnp.linalg.norm(centers, axis=-1)
    soft = a / norm
    return jax.nn.softmax(soft, axis=-1)


if __name__ == "__main__":
    # Small, module-consistent shapes: batch=8 feature vectors,
    # embedding_dimension=32, cluster_number=4.
    B, D, K = 8, 32, 4
    centers = jnp.asarray(init_cluster_centers(K, D, seed=0, orthogonal=True))
    key = jax.random.PRNGKey(0)
    batch = jax.random.normal(key, (B, D), dtype=jnp.float32)

    ref = cluster_assignment_ref(batch, centers)

    # Default path: bf16 operands on the MXU (per perf review), f32 softmax.
    out_bf16 = jax.block_until_ready(cluster_assignment(batch, centers))
    assert out_bf16.shape == (B, K)
    np.testing.assert_allclose(np.asarray(out_bf16), np.asarray(ref),
                               rtol=3e-2, atol=3e-2)
    # Exact normalization: rows must sum to 1.
    np.testing.assert_allclose(np.asarray(out_bf16).sum(-1), np.ones(B),
                               rtol=1e-5, atol=1e-5)

    # Full-f32 operands for tight numerical validation.
    out_f32 = jax.block_until_ready(
        cluster_assignment(batch, centers, compute_dtype=jnp.float32))
    np.testing.assert_allclose(np.asarray(out_f32), np.asarray(ref),
                               rtol=5e-4, atol=5e-4)

    # Ragged batch + non-power-of-two K: exercises the masked last tile and
    # the compile-time cluster-pad mask.
    B2, K2 = 37, 6
    k1, k2 = jax.random.split(jax.random.PRNGKey(0))
    batch2 = jax.random.normal(k1, (B2, D), dtype=jnp.float32)
    centers2 = jax.random.normal(k2, (K2, D), dtype=jnp.float32)
    out2 = jax.block_until_ready(
        cluster_assignment(batch2, centers2, compute_dtype=jnp.float32))
    ref2 = cluster_assignment_ref(batch2, centers2)
    assert out2.shape == (B2, K2)
    np.testing.assert_allclose(np.asarray(out2), np.asarray(ref2),
                               rtol=5e-4, atol=5e-4)

    print("KERNEL_OK")
</pallas_src>

<mosaic_0001>
module attributes {stable_mosaic.version = 11 : i64} {
  func.func @kernel(%arg0: i32, %arg1: memref<128x32xbf16, #tpu.memory_space<vmem>>, %arg2: memref<32x128xbf16, #tpu.memory_space<vmem>>, %arg3: memref<128x4xf32, #tpu.memory_space<vmem>>) attributes {dimension_semantics = [#tpu.dimension_semantics<parallel>], iteration_bounds = array<i64: 1>, scalar_prefetch = 0 : i64, scratch_operands = 0 : i64, tpu.core_type = #tpu.core_type<tc>, window_params = [{transform_indices = @transform_0, window_bounds = array<i64: 128, 32>}, {pipeline_mode = #tpu.pipeline_mode<synchronous>, transform_indices = @transform_1, window_bounds = array<i64: 32, 128>}, {transform_indices = @transform_2, window_bounds = array<i64: 128, 4>}]} {
    %c0 = arith.constant 0 : index
    %c0_0 = arith.constant 0 : index
    %0 = vector.load %arg1[%c0, %c0_0] : memref<128x32xbf16, #tpu.memory_space<vmem>>, vector<128x32xbf16>
    %c0_1 = arith.constant 0 : index
    %c0_2 = arith.constant 0 : index
    %1 = vector.load %arg2[%c0_1, %c0_2] : memref<32x128xbf16, #tpu.memory_space<vmem>>, vector<32x128xbf16>
    %cst = arith.constant dense<0.000000e+00> : vector<128x128xf32>
    %2 = tpu.matmul %0, %1, %cst {dimension_numbers = #tpu.dot_dimension_numbers<[1], [0], [0], [1], [0, 0, 1, 1], [], []>} : vector<128x32xbf16>, vector<32x128xbf16>, vector<128x128xf32> -> vector<128x128xf32>
    %3 = arith.mulf %2, %2 : vector<128x128xf32>
    %4 = tpu.iota {dimensions = array<i32: 1>} : vector<1x128xi32>
    %c4_i32 = arith.constant 4 : i32
    %5 = vector.broadcast %c4_i32 : i32 to vector<1x128xi32>
    %6 = arith.cmpi slt, %4, %5 : vector<1x128xi32>
    %cst_3 = arith.constant -1.000000e+30 : f32
    %7 = vector.shape_cast %6 : vector<1x128xi1> to vector<1x128xi1>
    %8 = vector.broadcast %7 : vector<1x128xi1> to vector<128x128xi1>
    %9 = vector.broadcast %cst_3 : f32 to vector<128x128xf32>
    %10 = arith.select %8, %3, %9 : vector<128x128xi1>, vector<128x128xf32>
    %cst_4 = arith.constant dense<0xFF800000> : vector<128xf32>
    %11 = vector.multi_reduction <maximumf>, %10, %cst_4 [1] : vector<128x128xf32> to vector<128xf32>
    %12 = vector.shape_cast %11 : vector<128xf32> to vector<128x1xf32>
    %13 = vector.broadcast %12 : vector<128x1xf32> to vector<128x128xf32>
    %14 = arith.subf %10, %13 : vector<128x128xf32>
    %15 = math.exp %14 : vector<128x128xf32>
    %cst_5 = arith.constant dense<0.000000e+00> : vector<128xf32>
    %16 = vector.multi_reduction <add>, %15, %cst_5 [1] : vector<128x128xf32> to vector<128xf32>
    %17 = vector.shape_cast %16 : vector<128xf32> to vector<128x1xf32>
    %18 = vector.broadcast %17 : vector<128x1xf32> to vector<128x128xf32>
    %19 = arith.divf %15, %18 : vector<128x128xf32>
    %20 = vector.extract_strided_slice %19 {offsets = [0, 0], sizes = [128, 4], strides = [1, 1]} : vector<128x128xf32> to vector<128x4xf32>
    %c0_6 = arith.constant 0 : index
    %c0_7 = arith.constant 0 : index
    %21 = vector.load %arg3[%c0_6, %c0_7] : memref<128x4xf32, #tpu.memory_space<vmem>>, vector<128x4xf32>
    tpu.vector_store %arg3[%c0_6, %c0_7], %20 {strides = array<i32>} : memref<128x4xf32, #tpu.memory_space<vmem>>, vector<128x4xf32>,
    return
  }
  func.func @transform_0(%arg0: i32) -> (i32, i32) {
    %c0_i32 = arith.constant 0 : i32
    %c0_i32_0 = arith.constant 0 : i32
    return %arg0, %c0_i32 : i32, i32
  }
  func.func @transform_1(%arg0: i32) -> (i32, i32) {
    %c0_i32 = arith.constant 0 : i32
    %c0_i32_0 = arith.constant 0 : i32
    %c0_i32_1 = arith.constant 0 : i32
    return %c0_i32, %c0_i32_0 : i32, i32
  }
  func.func @transform_2(%arg0: i32) -> (i32, i32) {
    %c0_i32 = arith.constant 0 : i32
    %c0_i32_0 = arith.constant 0 : i32
    return %arg0, %c0_i32 : i32, i32
  }
}

</mosaic_0001>

<llo_original>
// kernel: tpu_custom_call.1
$region0: #{tpu_custom_call.1}
  #allocation0 [shape = 'u32[]', space=smem, size = 0x4, offset = 0x4, fixed_abs, tag = 'smem constant byte address 0x4 - core index']
  #allocation1 [shape = 'u32[144,128]{1,0:T(1,128)}', space=vmem, size = 0x12000, scoped, tag = 'internal scratch']
  %s0 = inlined_call_operand.hbm [shape: bf16[8,32], index: 0, kind: input, shape index: {}]
  %s1 = inlined_call_operand.hbm [shape: bf16[32,128], index: 1, kind: input, shape index: {}]
  %s2 = inlined_call_operand.vmem [shape: f32[8,4], index: 2, kind: output, shape index: {}]
  %s3 = sld [smem:[#allocation0]]
  $region60: #{tpu_custom_call.1} parent=0
    _
  %s5 = ssub.s32 1, %s3
  %s6 = scalar_select 0, %s5, %s3
  $region1: #{tpu_custom_call.1} parent=0
    #allocation2 [shape = 'u8[32768]{0}', space=vmem, size = 0x8000, scoped, tag = 'input window, operand 0, single buffered']
    #allocation3 [shape = 's32[1]{0}', space=sflag, size = 0x4, scoped, tag = 'scoped memory for tpu_custom_call.1']
    #allocation4 [shape = 'u8[8192]{0}', space=vmem, size = 0x2000, scoped, tag = 'input window, operand 1, single buffered']
    #allocation5 [shape = 's32[1]{0}', space=sflag, size = 0x4, scoped, tag = 'scoped memory for tpu_custom_call.1']
    #allocation6 [shape = 'u8[65536]{0}', space=vmem, size = 0x10000, scoped, tag = 'output window, operand 0, single buffered']
    %7 = vsyncpa [#allocation3], 0
    %8 = vsyncpa [#allocation5], 0
    // Predicated region
    $region2: #{tpu_custom_call.1} parent=1 // pred_check
      _
    $region3: #{tpu_custom_call.1} parent=1 // pred_check_branch
      %10 = sbr.rel (0) target = $region5
    $region4: #{tpu_custom_call.1} parent=1 // pred_region
      %s12 = ssub.s32 1024, 64
      %13 = vsyncadd [#allocation3], %s12
      %s14 = sshll.u32 [#allocation2], 4
      %s15 = int_to_ptr.vmem [resolvable:$true] %s14
      %20 = dma.hbm_to_vmem [thread:$0]  %s0, 64, %s15, [#allocation3], 64, 64, 4
    $region5: #{tpu_custom_call.1} parent=1 // pred_fallthru
      _
    // Predicated region
    $region6: #{tpu_custom_call.1} parent=1 // pred_check
      _
    $region7: #{tpu_custom_call.1} parent=1 // pred_check_branch
      %22 = sbr.rel (0) target = $region9
    $region8: #{tpu_custom_call.1} parent=1 // pred_region
      %s24 = ssub.s32 256, 256
      %25 = vsyncadd [#allocation5], %s24
      %s26 = sshll.u32 [#allocation4], 4
      %s27 = int_to_ptr.vmem [resolvable:$true] %s26
      %32 = dma.hbm_to_vmem [thread:$0]  %s1, 256, %s27, [#allocation5], 64, 64, 4
    $region9: #{tpu_custom_call.1} parent=1 // pred_fallthru
      _
    // Predicated region
    $region10: #{tpu_custom_call.1} parent=1 // pred_check
      _
    $region11: #{tpu_custom_call.1} parent=1 // pred_check_branch
      %34 = sbr.rel (0) target = $region13
    $region12: #{tpu_custom_call.1} parent=1 // pred_region
      %35 = dma.done [#allocation3], 1024
    $region13: #{tpu_custom_call.1} parent=1 // pred_fallthru
      _
    // Predicated region
    $region14: #{tpu_custom_call.1} parent=1 // pred_check
      _
    $region15: #{tpu_custom_call.1} parent=1 // pred_check_branch
      %37 = sbr.rel (0) target = $region17
    $region16: #{tpu_custom_call.1} parent=1 // pred_region
      %38 = dma.done [#allocation5], 256
    $region17: #{tpu_custom_call.1} parent=1 // pred_fallthru
      _
    %v40 = vld [vmem:[#allocation2] sm:$0xf]
    %v41 = vld [vmem:[#allocation2 + $0x4] sm:$0xf]
    %v42 = vld [vmem:[#allocation2 + $0x8] sm:$0xf]
    %v43 = vld [vmem:[#allocation2 + $0xc] sm:$0xf]
    %v44 = vld [vmem:[#allocation2 + $0x10] sm:$0xf]
    %v45 = vld [vmem:[#allocation2 + $0x14] sm:$0xf]
    %v46 = vld [vmem:[#allocation2 + $0x18] sm:$0xf]
    %v47 = vld [vmem:[#allocation2 + $0x1c] sm:$0xf]
    %v48 = vld [vmem:[#allocation2 + $0x20] sm:$0xf]
    %v49 = vld [vmem:[#allocation2 + $0x24] sm:$0xf]
    %v50 = vld [vmem:[#allocation2 + $0x28] sm:$0xf]
    %v51 = vld [vmem:[#allocation2 + $0x2c] sm:$0xf]
    %v52 = vld [vmem:[#allocation2 + $0x30] sm:$0xf]
    %v53 = vld [vmem:[#allocation2 + $0x34] sm:$0xf]
    %v54 = vld [vmem:[#allocation2 + $0x38] sm:$0xf]
    %v55 = vld [vmem:[#allocation2 + $0x3c] sm:$0xf]
    %v56 = vld [vmem:[#allocation4] sm:$0xf]
    %v57 = vld [vmem:[#allocation4 + $0x4] sm:$0xf]
    %v58 = vld [vmem:[#allocation4 + $0x8] sm:$0xf]
    %v59 = vld [vmem:[#allocation4 + $0xc] sm:$0xf]
    %v76 = vunpack.c.l.b16 %v40
    %v77 = vunpack.c.l.b16 %v41
    %v78 = vunpack.c.l.b16 %v42
    %v79 = vunpack.c.l.b16 %v43
    %v80 = vunpack.c.l.b16 %v44
    %v81 = vunpack.c.l.b16 %v45
    %v82 = vunpack.c.l.b16 %v46
    %v83 = vunpack.c.l.b16 %v47
    %v84 = vunpack.c.l.b16 %v48
    %v85 = vunpack.c.l.b16 %v49
    %v86 = vunpack.c.l.b16 %v50
    %v87 = vunpack.c.l.b16 %v51
    %v88 = vunpack.c.l.b16 %v52
    %v89 = vunpack.c.l.b16 %v53
    %v90 = vunpack.c.l.b16 %v54
    %v91 = vunpack.c.l.b16 %v55
    %v92 = vpack.c.b16 %v77, %v76
    %v93 = vpack.c.b16 %v79, %v78
    %v94 = vpack.c.b16 %v81, %v80
    %v95 = vpack.c.b16 %v83, %v82
    %v96 = vpack.c.b16 %v85, %v84
    %v97 = vpack.c.b16 %v87, %v86
    %v98 = vpack.c.b16 %v89, %v88
    %v99 = vpack.c.b16 %v91, %v90
    %v104 = vunpack.c.l.b16 %v56
    %v105 = vunpack.c.l.b16 %v57
    %v106 = vunpack.c.l.b16 %v58
    %v107 = vunpack.c.l.b16 %v59
    %v108 = vpack.c.b16 %v105, %v104
    %v109 = vpack.c.b16 %v107, %v106
    %vm112 = vcmask 261120
    %v114 = vsel %vm112, %v92, 0
    %v117 = vsel %vm112, %v93, 0
    %v120 = vsel %vm112, %v94, 0
    %v123 = vsel %vm112, %v95, 0
    %v126 = vsel %vm112, %v96, 0
    %v129 = vsel %vm112, %v97, 0
    %v132 = vsel %vm112, %v98, 0
    %v135 = vsel %vm112, %v99, 0
    %137 = vmatprep.subr.bf16.mxu0 0
    %138 = vmatpush1.bf16.msra.mxu0 %v108
    %139 = vmatprep.subr.bf16.mxu0 0
    %140 = vmatpush1.bf16.msra.mxu0 %v109
    %141 = vmatprep.subr.bf16.mxu0 0
    %142 = vmatpush1.bf16.msra.mxu0 0
    %143 = vmatprep.subr.bf16.mxu0 0
    %144 = vmatpush1.bf16.msra.mxu0 0
    %145 = vmatprep.subr.bf16.mxu0 0
    %146 = vmatpush1.bf16.msra.mxu0 0
    %147 = vmatprep.subr.bf16.mxu0 0
    %148 = vmatpush1.bf16.msra.mxu0 0
    %149 = vmatprep.subr.bf16.mxu0 0
    %150 = vmatpush1.bf16.msra.mxu0 0
    %151 = vmatprep.subr.bf16.mxu0 0
    %152 = vmatpush1.bf16.msra.mxu0 0
    %153 = vmatprep.subr.bf16.mxu0 0
    %154 = vmatpush1.bf16.msra.mxu0 0
    %155 = vmatprep.subr.bf16.mxu0 0
    %156 = vmatpush1.bf16.msra.mxu0 0
    %157 = vmatprep.subr.bf16.mxu0 0
    %158 = vmatpush1.bf16.msra.mxu0 0
    %159 = vmatprep.subr.bf16.mxu0 0
    %160 = vmatpush1.bf16.msra.mxu0 0
    %161 = vmatprep.subr.bf16.mxu0 0
    %162 = vmatpush1.bf16.msra.mxu0 0
    %163 = vmatprep.subr.bf16.mxu0 0
    %164 = vmatpush1.bf16.msra.mxu0 0
    %165 = vmatprep.subr.bf16.mxu0 0
    %166 = vmatpush1.bf16.msra.mxu0 0
    %167 = vmatprep.subr.bf16.mxu0 0
    %168 = vmatpush1.bf16.msra.mxu0 0
    %169 = vmatprep.mubr.bf16.mxu0 0
    %170 = vmatmul.mubr.bf16.gmra.mrb[0].mxu0 %v114
    %v171 = vpop.f32.mrb[0].mxu0
    %v172 = vadd.f32 0.0, %v171
    %v173 = vpop.f32.mrb[0].mxu0
    %v174 = vpop.f32.mrb[0].mxu0
    %v175 = vadd.f32 0.0, %v174
    %v176 = vpop.f32.mrb[0].mxu0
    %177 = vmatprep.mubr.bf16.mxu0 0
    %178 = vmatmul.mubr.bf16.gmra.mrb[0].mxu0 %v117
    %v179 = vpop.f32.mrb[0].mxu0
    %v180 = vadd.f32 0.0, %v179
    %v181 = vpop.f32.mrb[0].mxu0
    %v182 = vpop.f32.mrb[0].mxu0
    %v183 = vadd.f32 0.0, %v182
    %v184 = vpop.f32.mrb[0].mxu0
    %185 = vmatprep.mubr.bf16.mxu0 0
    %186 = vmatmul.mubr.bf16.gmra.mrb[0].mxu0 %v120
    %v187 = vpop.f32.mrb[0].mxu0
    %v188 = vadd.f32 0.0, %v187
    %v189 = vpop.f32.mrb[0].mxu0
    %v190 = vpop.f32.mrb[0].mxu0
    %v191 = vadd.f32 0.0, %v190
    %v192 = vpop.f32.mrb[0].mxu0
    %193 = vmatprep.mubr.bf16.mxu0 0
    %194 = vmatmul.mubr.bf16.gmra.mrb[0].mxu0 %v123
    %v195 = vpop.f32.mrb[0].mxu0
    %v196 = vadd.f32 0.0, %v195
    %v197 = vpop.f32.mrb[0].mxu0
    %v198 = vpop.f32.mrb[0].mxu0
    %v199 = vadd.f32 0.0, %v198
    %v200 = vpop.f32.mrb[0].mxu0
    %201 = vmatprep.mubr.bf16.mxu0 0
    %202 = vmatmul.mubr.bf16.gmra.mrb[0].mxu0 %v126
    %v203 = vpop.f32.mrb[0].mxu0
    %v204 = vadd.f32 0.0, %v203
    %v205 = vpop.f32.mrb[0].mxu0
    %v206 = vpop.f32.mrb[0].mxu0
    %v207 = vadd.f32 0.0, %v206
    %v208 = vpop.f32.mrb[0].mxu0
    %209 = vmatprep.mubr.bf16.mxu0 0
    %210 = vmatmul.mubr.bf16.gmra.mrb[0].mxu0 %v129
    %v211 = vpop.f32.mrb[0].mxu0
    %v212 = vadd.f32 0.0, %v211
    %v213 = vpop.f32.mrb[0].mxu0
    %v214 = vpop.f32.mrb[0].mxu0
    %v215 = vadd.f32 0.0, %v214
    %v216 = vpop.f32.mrb[0].mxu0
    %217 = vmatprep.mubr.bf16.mxu0 0
    %218 = vmatmul.mubr.bf16.gmra.mrb[0].mxu0 %v132
    %v219 = vpop.f32.mrb[0].mxu0
    %v220 = vadd.f32 0.0, %v219
    %v221 = vpop.f32.mrb[0].mxu0
    %v222 = vpop.f32.mrb[0].mxu0
    %v223 = vadd.f32 0.0, %v222
    %v224 = vpop.f32.mrb[0].mxu0
    %225 = vmatprep.mubr.bf16.mxu0 0
    %226 = vmatmul.mubr.bf16.gmra.mrb[0].mxu0 %v135
    %v227 = vpop.f32.mrb[0].mxu0
    %v228 = vadd.f32 0.0, %v227
    %v229 = vpop.f32.mrb[0].mxu0
    %v230 = vpop.f32.mrb[0].mxu0
    %v231 = vadd.f32 0.0, %v230
    %v232 = vpop.f32.mrb[0].mxu0
    %233 = vdwg.mxu0
    %v234 = vmul.f32 %v172, %v172
    %v235 = vmul.f32 %v175, %v175
    %v236 = vmul.f32 %v180, %v180
    %v237 = vmul.f32 %v183, %v183
    %v238 = vmul.f32 %v188, %v188
    %v239 = vmul.f32 %v191, %v191
    %v240 = vmul.f32 %v196, %v196
    %v241 = vmul.f32 %v199, %v199
    %v242 = vmul.f32 %v204, %v204
    %v243 = vmul.f32 %v207, %v207
    %v244 = vmul.f32 %v212, %v212
    %v245 = vmul.f32 %v215, %v215
    %v246 = vmul.f32 %v220, %v220
    %v247 = vmul.f32 %v223, %v223
    %v248 = vmul.f32 %v228, %v228
    %v249 = vmul.f32 %v231, %v231
    %v250 = vlaneseq
    %v251 = vand.u32 %v250, 127
    %vm252 = vcmp.lt.s32.totalorder %v251, 4
    %v253 = vsel %vm252, 1, 0
    %vm254 = vcmp.eq.s32.totalorder %v253, 1
    %v255 = vsel %vm254, %v234, -1e+30
    %v256 = vsel %vm254, %v235, -1e+30
    %v257 = vsel %vm254, %v236, -1e+30
    %v258 = vsel %vm254, %v237, -1e+30
    %v259 = vsel %vm254, %v238, -1e+30
    %v260 = vsel %vm254, %v239, -1e+30
    %v261 = vsel %vm254, %v240, -1e+30
    %v262 = vsel %vm254, %v241, -1e+30
    %v263 = vsel %vm254, %v242, -1e+30
    %v264 = vsel %vm254, %v243, -1e+30
    %v265 = vsel %vm254, %v244, -1e+30
    %v266 = vsel %vm254, %v245, -1e+30
    %v267 = vsel %vm254, %v246, -1e+30
    %v268 = vsel %vm254, %v247, -1e+30
    %v269 = vsel %vm254, %v248, -1e+30
    %v270 = vsel %vm254, %v249, -1e+30
    %271 = vmax.xlane.f32.xlu0 %v255
    %v272 = vpop.xlane.xlu0 %271
    %273 = vmax.xlane.f32.xlu0 %v256
    %v274 = vpop.xlane.xlu0 %273
    %275 = vmax.xlane.f32.xlu0 %v257
    %v276 = vpop.xlane.xlu0 %275
    %277 = vmax.xlane.f32.xlu0 %v258
    %v278 = vpop.xlane.xlu0 %277
    %279 = vmax.xlane.f32.xlu0 %v259
    %v280 = vpop.xlane.xlu0 %279
    %281 = vmax.xlane.f32.xlu0 %v260
    %v282 = vpop.xlane.xlu0 %281
    %283 = vmax.xlane.f32.xlu0 %v261
    %v284 = vpop.xlane.xlu0 %283
    %285 = vmax.xlane.f32.xlu0 %v262
    %v286 = vpop.xlane.xlu0 %285
    %287 = vmax.xlane.f32.xlu0 %v263
    %v288 = vpop.xlane.xlu0 %287
    %289 = vmax.xlane.f32.xlu0 %v264
    %v290 = vpop.xlane.xlu0 %289
    %291 = vmax.xlane.f32.xlu0 %v265
    %v292 = vpop.xlane.xlu0 %291
    %293 = vmax.xlane.f32.xlu0 %v266
    %v294 = vpop.xlane.xlu0 %293
    %295 = vmax.xlane.f32.xlu0 %v267
    %v296 = vpop.xlane.xlu0 %295
    %297 = vmax.xlane.f32.xlu0 %v268
    %v298 = vpop.xlane.xlu0 %297
    %299 = vmax.xlane.f32.xlu0 %v269
    %v300 = vpop.xlane.xlu0 %299
    %301 = vmax.xlane.f32.xlu0 %v270
    %v302 = vpop.xlane.xlu0 %301
    %v303 = vsub.f32 %v255, %v272
    %v304 = vsub.f32 %v256, %v274
    %v305 = vsub.f32 %v257, %v276
    %v306 = vsub.f32 %v258, %v278
    %v307 = vsub.f32 %v259, %v280
    %v308 = vsub.f32 %v260, %v282
    %v309 = vsub.f32 %v261, %v284
    %v310 = vsub.f32 %v262, %v286
    %v311 = vsub.f32 %v263, %v288
    %v312 = vsub.f32 %v264, %v290
    %v313 = vsub.f32 %v265, %v292
    %v314 = vsub.f32 %v266, %v294
    %v315 = vsub.f32 %v267, %v296
    %v316 = vsub.f32 %v268, %v298
    %v317 = vsub.f32 %v269, %v300
    %v318 = vsub.f32 %v270, %v302
    %v319 = vmul.f32 %v303, 1.442695
    %v320 = vpow.pop %v319
    %v321 = vmul.f32 %v304, 1.442695
    %v322 = vpow.pop %v321
    %v323 = vmul.f32 %v305, 1.442695
    %v324 = vpow.pop %v323
    %v325 = vmul.f32 %v306, 1.442695
    %v326 = vpow.pop %v325
    %v327 = vmul.f32 %v307, 1.442695
    %v328 = vpow.pop %v327
    %v329 = vmul.f32 %v308, 1.442695
    %v330 = vpow.pop %v329
    %v331 = vmul.f32 %v309, 1.442695
    %v332 = vpow.pop %v331
    %v333 = vmul.f32 %v310, 1.442695
    %v334 = vpow.pop %v333
    %v335 = vmul.f32 %v311, 1.442695
    %v336 = vpow.pop %v335
    %v337 = vmul.f32 %v312, 1.442695
    %v338 = vpow.pop %v337
    %v339 = vmul.f32 %v313, 1.442695
    %v340 = vpow.pop %v339
    %v341 = vmul.f32 %v314, 1.442695
    %v342 = vpow.pop %v341
    %v343 = vmul.f32 %v315, 1.442695
    %v344 = vpow.pop %v343
    %v345 = vmul.f32 %v316, 1.442695
    %v346 = vpow.pop %v345
    %v347 = vmul.f32 %v317, 1.442695
    %v348 = vpow.pop %v347
    %v349 = vmul.f32 %v318, 1.442695
    %v350 = vpow.pop %v349
    %351 = vadd.xlane.f32.xlu0 %v320
    %v352 = vpop.xlane.xlu0 %351
    %353 = vadd.xlane.f32.xlu0 %v322
    %v354 = vpop.xlane.xlu0 %353
    %355 = vadd.xlane.f32.xlu0 %v324
    %v356 = vpop.xlane.xlu0 %355
    %357 = vadd.xlane.f32.xlu0 %v326
    %v358 = vpop.xlane.xlu0 %357
    %359 = vadd.xlane.f32.xlu0 %v328
    %v360 = vpop.xlane.xlu0 %359
    %361 = vadd.xlane.f32.xlu0 %v330
    %v362 = vpop.xlane.xlu0 %361
    %363 = vadd.xlane.f32.xlu0 %v332
    %v364 = vpop.xlane.xlu0 %363
    %365 = vadd.xlane.f32.xlu0 %v334
    %v366 = vpop.xlane.xlu0 %365
    %367 = vadd.xlane.f32.xlu0 %v336
    %v368 = vpop.xlane.xlu0 %367
    %369 = vadd.xlane.f32.xlu0 %v338
    %v370 = vpop.xlane.xlu0 %369
    %371 = vadd.xlane.f32.xlu0 %v340
    %v372 = vpop.xlane.xlu0 %371
    %373 = vadd.xlane.f32.xlu0 %v342
    %v374 = vpop.xlane.xlu0 %373
    %375 = vadd.xlane.f32.xlu0 %v344
    %v376 = vpop.xlane.xlu0 %375
    %377 = vadd.xlane.f32.xlu0 %v346
    %v378 = vpop.xlane.xlu0 %377
    %379 = vadd.xlane.f32.xlu0 %v348
    %v380 = vpop.xlane.xlu0 %379
    %381 = vadd.xlane.f32.xlu0 %v350
    %v382 = vpop.xlane.xlu0 %381
    %v383 = vrcp.pop %v352
    %v384 = vmul.f32 %v320, %v383
    %v385 = vrcp.pop %v354
    %v386 = vmul.f32 %v322, %v385
    %v387 = vrcp.pop %v356
    %v388 = vmul.f32 %v324, %v387
    %v389 = vrcp.pop %v358
    %v390 = vmul.f32 %v326, %v389
    %v391 = vrcp.pop %v360
    %v392 = vmul.f32 %v328, %v391
    %v393 = vrcp.pop %v362
    %v394 = vmul.f32 %v330, %v393
    %v395 = vrcp.pop %v364
    %v396 = vmul.f32 %v332, %v395
    %v397 = vrcp.pop %v366
    %v398 = vmul.f32 %v334, %v397
    %v399 = vrcp.pop %v368
    %v400 = vmul.f32 %v336, %v399
    %v401 = vrcp.pop %v370
    %v402 = vmul.f32 %v338, %v401
    %v403 = vrcp.pop %v372
    %v404 = vmul.f32 %v340, %v403
    %v405 = vrcp.pop %v374
    %v406 = vmul.f32 %v342, %v405
    %v407 = vrcp.pop %v376
    %v408 = vmul.f32 %v344, %v407
    %v409 = vrcp.pop %v378
    %v410 = vmul.f32 %v346, %v409
    %v411 = vrcp.pop %v380
    %v412 = vmul.f32 %v348, %v411
    %v413 = vrcp.pop %v382
    %v414 = vmul.f32 %v350, %v413
    %vm415 = vcmask 31744
    %416 = vst.msk [vmem:[#allocation6] sm:$0xff] %vm415, %v384
    %417 = vst.msk [vmem:[#allocation6 + $0x8] sm:$0xff] %vm415, %v386
    %418 = vst.msk [vmem:[#allocation6 + $0x10] sm:$0xff] %vm415, %v388
    %419 = vst.msk [vmem:[#allocation6 + $0x18] sm:$0xff] %vm415, %v390
    %420 = vst.msk [vmem:[#allocation6 + $0x20] sm:$0xff] %vm415, %v392
    %421 = vst.msk [vmem:[#allocation6 + $0x28] sm:$0xff] %vm415, %v394
    %422 = vst.msk [vmem:[#allocation6 + $0x30] sm:$0xff] %vm415, %v396
    %423 = vst.msk [vmem:[#allocation6 + $0x38] sm:$0xff] %vm415, %v398
    %424 = vst.msk [vmem:[#allocation6 + $0x40] sm:$0xff] %vm415, %v400
    %425 = vst.msk [vmem:[#allocation6 + $0x48] sm:$0xff] %vm415, %v402
    %426 = vst.msk [vmem:[#allocation6 + $0x50] sm:$0xff] %vm415, %v404
    %427 = vst.msk [vmem:[#allocation6 + $0x58] sm:$0xff] %vm415, %v406
    %428 = vst.msk [vmem:[#allocation6 + $0x60] sm:$0xff] %vm415, %v408
    %429 = vst.msk [vmem:[#allocation6 + $0x68] sm:$0xff] %vm415, %v410
    %430 = vst.msk [vmem:[#allocation6 + $0x70] sm:$0xff] %vm415, %v412
    %431 = vst.msk [vmem:[#allocation6 + $0x78] sm:$0xff] %vm415, %v414
    // Predicated region
    $region18: #{tpu_custom_call.1} parent=1 // pred_check
      _
    $region19: #{tpu_custom_call.1} parent=1 // pred_check_branch
      %433 = sbr.rel (0) target = $region21
    $region20: #{tpu_custom_call.1} parent=1 // pred_region
      // Predicated region
      $region22: #{tpu_custom_call.1} parent=20 // pred_check
        _
      $region23: #{tpu_custom_call.1} parent=20 // pred_check_branch
        %435 = sbr.rel (0) target = $region25
      $region24: #{tpu_custom_call.1} parent=20 // pred_region
        // Predicated region
        $region26: #{tpu_custom_call.1} parent=24 // pred_check
          _
        $region27: #{tpu_custom_call.1} parent=24 // pred_check_branch
          %437 = sbr.rel (0) target = $region29
        $region28: #{tpu_custom_call.1} parent=24 // pred_region
          // Predicated region
          $region41: #{tpu_custom_call.1} parent=28 // pred_check
            _
          $region42: #{tpu_custom_call.1} parent=28 // pred_check_branch
            %452 = sbr.rel (0) target = $region44
          $region43: #{tpu_custom_call.1} parent=28 // pred_region
            loop: start=0, step=1, limit=1
            $region45: #{tpu_custom_call.1} parent=43 // loop_pre_header
              _
            $region46: #{tpu_custom_call.1} parent=43 // loop_header
              %s454 = sphi 0, %s458
              %p455 = scmp.ge.s32.totalorder %s454, 1
              %s459 = sphi [#allocation6], [#allocation6]
              %s460 = sphi %s2, %s2
            $region47: #{tpu_custom_call.1} parent=43 // loop_header_branch
              %457 = sbr.rel (%p455) target = $region51
            $region48: #{tpu_custom_call.1} parent=43 // loop_body
              %v461 = vld [vmem:[%s459] sm:$0xff]
              %462 = vst [vmem:[%s460] sm:$0xff] %v461
            $region49: #{tpu_custom_call.1} parent=43 // loop_footer
              %s458 = sadd.s32 1, %s454
            $region50: #{tpu_custom_call.1} parent=43 // loop_footer_branch
              %453 = sbr.rel target = $region46
            $region51: #{tpu_custom_call.1} parent=43 // loop_exit
              _
          $region44: #{tpu_custom_call.1} parent=28 // pred_fallthru
            _
          // Predicated region
          $region52: #{tpu_custom_call.1} parent=28 // pred_check
            _
          $region53: #{tpu_custom_call.1} parent=28 // pred_check_branch
            %464 = sbr.rel target = $region55
          $region54: #{tpu_custom_call.1} parent=28 // pred_region
            _
          $region55: #{tpu_custom_call.1} parent=28 // pred_fallthru
            _
        $region29: #{tpu_custom_call.1} parent=24 // pred_fallthru
          _
        // Predicated region
        $region30: #{tpu_custom_call.1} parent=24 // pred_check
          _
        $region31: #{tpu_custom_call.1} parent=24 // pred_check_branch
          %439 = sbr.rel target = $region33
        $region32: #{tpu_custom_call.1} parent=24 // pred_region
          loop: start=0, step=1, limit=1
          $region34: #{tpu_custom_call.1} parent=32 // loop_pre_header
            _
          $region35: #{tpu_custom_call.1} parent=32 // loop_header
            %s442 = sphi 0, %s446
            %p443 = scmp.ge.s32.totalorder %s442, 1
            %s447 = sphi [#allocation6], [#allocation6]
            %s448 = sphi %s2, %s2
          $region36: #{tpu_custom_call.1} parent=32 // loop_header_branch
            %445 = sbr.rel (%p443) target = $region40
          $region37: #{tpu_custom_call.1} parent=32 // loop_body
            %v449 = vld [vmem:[%s447] sm:$0xff]
            %450 = vst [vmem:[%s448] sm:$0xff] %v449
          $region38: #{tpu_custom_call.1} parent=32 // loop_footer
            %s446 = sadd.s32 1, %s442
          $region39: #{tpu_custom_call.1} parent=32 // loop_footer_branch
            %441 = sbr.rel target = $region35
          $region40: #{tpu_custom_call.1} parent=32 // loop_exit
            _
        $region33: #{tpu_custom_call.1} parent=24 // pred_fallthru
          _
      $region25: #{tpu_custom_call.1} parent=20 // pred_fallthru
        _
      %465 = vnop
    $region21: #{tpu_custom_call.1} parent=1 // pred_fallthru
      _
    // Predicated region
    $region56: #{tpu_custom_call.1} parent=1 // pred_check
      _
    $region57: #{tpu_custom_call.1} parent=1 // pred_check_branch
      %467 = sbr.rel (0) target = $region59
    $region58: #{tpu_custom_call.1} parent=1 // pred_region
      _
    $region59: #{tpu_custom_call.1} parent=1 // pred_fallthru
      _
    %468 = vsyncpa [#allocation3], 1
    %469 = vsyncpa [#allocation5], 1

</llo_original>
